<compile_context>
chip_gen: v6e
topology: v6e:2x2x1
jax: 0.10.0
libtpu: 0.0.40
codegen_flags: <defaults>
</compile_context>

<pallas_src>
import jax
import jax.numpy as jnp
from jax import lax
from jax.experimental import pallas as pl
from jax.experimental.pallas import tpu as pltpu

EPS = 1e-5                        # nn.LayerNorm default
_TARGET_BLOCK_BYTES = 8 << 20     # ~8 MiB blocks -> 4 double-buffered data bufs ~ 32 MiB


def _ceil_to(x, m):
    return -(-x // m) * m


# ---------------------------------------------------------------------------
# Kernels
# ---------------------------------------------------------------------------

def _ln_nchw_kernel(x_ref, g_ref, b_ref, o_ref):
    # x_ref: (C, T) tile — channels on sublanes, spatial positions on lanes.
    # g_ref/b_ref: (C, 1) affine params, broadcast across lanes.
    #
    # Padded *sublanes* (C % 8 != 0) are masked out of the reductions by
    # Mosaic.  Padded *lanes* of an edge spatial tile hold stale VMEM: they
    # produce garbage (including rsqrt of garbage) that the masked writeback
    # discards — per-lane math means they never contaminate valid lanes, so
    # do NOT "fix" this with an explicit (expensive) mask.
    x = x_ref[...].astype(jnp.float32)
    inv_c = 1.0 / x_ref.shape[0]
    s1 = jnp.sum(x, axis=0, keepdims=True)            # (1, T)
    s2 = jnp.sum(x * x, axis=0, keepdims=True)        # (1, T) — same traversal as s1
    mean = s1 * inv_c
    var = s2 * inv_c - mean * mean
    inv = lax.rsqrt(var + EPS)
    y = (x - mean) * inv
    y = y * g_ref[...].astype(jnp.float32) + b_ref[...].astype(jnp.float32)
    o_ref[...] = y.astype(o_ref.dtype)


def _ln_nhwc_kernel(x_ref, g_ref, b_ref, o_ref):
    # x_ref: (R, C) tile — flattened B*H*W rows on sublanes, C lane-dense.
    # g_ref/b_ref: (1, C) affine params, broadcast across rows.
    #
    # Padded rows of an edge tile hold stale VMEM; per-row math + masked
    # writeback make that harmless (see note in _ln_nchw_kernel).
    x = x_ref[...].astype(jnp.float32)
    inv_c = 1.0 / x_ref.shape[1]
    s1 = jnp.sum(x, axis=1, keepdims=True)             # (R, 1)
    s2 = jnp.sum(x * x, axis=1, keepdims=True)         # (R, 1)
    mean = s1 * inv_c
    var = s2 * inv_c - mean * mean
    inv = lax.rsqrt(var + EPS)
    y = (x - mean) * inv
    y = y * g_ref[...].astype(jnp.float32) + b_ref[...].astype(jnp.float32)
    o_ref[...] = y.astype(o_ref.dtype)


# ---------------------------------------------------------------------------
# Tile-size / VMEM heuristics
# ---------------------------------------------------------------------------

def _pick_tile_hw(C, HW, B, itemsize, target_block_bytes=_TARGET_BLOCK_BYTES):
    """Lane-axis tile for the NCHW-native kernel.

    Priorities: legal tile (multiple of 128 or full HW); per-channel strided
    DMA rows >= 512 B; block <= target bytes; >= 2 (ideally 4) total grid
    steps for megacore / pipelining; otherwise as large as possible.
    """
    min_lanes = max(128, _ceil_to(512 // itemsize, 128))   # f32:128  bf16:256  int8:512
    full_fits = C * HW * itemsize <= target_block_bytes
    if HW <= min_lanes or (full_fits and B >= 4):
        return int(HW)                                     # one full-extent lane block
    full128 = (HW // 128) * 128
    budget_lanes = (target_block_bytes // (C * itemsize)) // 128 * 128
    # If C is huge, even min_lanes overshoots the target; _vmem_limit_bytes()
    # scales the scoped limit to the real block size (large-C guard).
    lanes = max(min_lanes, min(full128, budget_lanes))
    for total_steps, min_block_bytes in ((4, 512 << 10), (2, 0)):
        tiles_needed = -(-total_steps // B)
        if tiles_needed <= 1:
            break                                          # batch axis alone is enough
        cand = (HW // tiles_needed) // 128 * 128
        if lanes <= cand:
            break                                          # budget tile already gives >= steps
        if cand >= min_lanes and C * cand * itemsize >= min_block_bytes:
            lanes = cand
            break
    return int(lanes)


def _pick_tile_rows(rows, C, itemsize, target_block_bytes=_TARGET_BLOCK_BYTES):
    """Sublane-axis row tile for the channels-last kernel (C fully lane-dense)."""
    budget = max(8, (target_block_bytes // (C * itemsize)) // 8 * 8)
    # >= 4 grid steps (2 per v7x core) while blocks stay >= 256 KiB, else >= 2.
    for total_steps, min_block_bytes in ((4, 256 << 10), (2, 0)):
        cand = _ceil_to(-(-rows // total_steps), 8)
        if cand < rows and C * cand * itemsize >= min_block_bytes:
            return int(min(cand, budget))
    return int(rows if rows <= budget else budget)


def _vmem_limit_bytes(block_bytes, param_bytes_each):
    # in + out data blocks double-buffered, two lane-padded params (counted as
    # double-buffered), plus slack for Mosaic internals.
    needed = 4 * block_bytes + 4 * param_bytes_each + (2 << 20)
    # 32 MiB floor clears every generation's scoped default (v5e: 16 MiB,
    # v6e/v7x: 32 MiB); actual usage stays well under v7x's 64 MiB physical
    # VMEM for normal Swin shapes.
    return int(max(32 << 20, needed))


# ---------------------------------------------------------------------------
# Forward wrappers
# ---------------------------------------------------------------------------

def _forward_nchw(x, gamma, beta):
    B, C, H, W = x.shape
    HW = H * W
    itemsize = jnp.dtype(x.dtype).itemsize

    # Free reshapes — contiguous dims merge, layout stays NCHW, no HBM traffic.
    x3 = x.reshape(B, C, HW)
    g2 = gamma.reshape(C, 1)
    b2 = beta.reshape(C, 1)

    tile_hw = _pick_tile_hw(C, HW, B, itemsize)
    n_tiles = pl.cdiv(HW, tile_hw)                 # partial edge block handled by masking
    block_bytes = C * tile_hw * itemsize
    param_bytes = _ceil_to(C, 8) * 128 * jnp.dtype(gamma.dtype).itemsize

    out3 = pl.pallas_call(
        _ln_nchw_kernel,
        out_shape=jax.ShapeDtypeStruct((B, C, HW), x.dtype),
        grid_spec=pltpu.PrefetchScalarGridSpec(
            num_scalar_prefetch=0,
            grid=(B, n_tiles),
            in_specs=[
                # Batch dim squeezed (None); kernel sees a (C, tile_hw) slab.
                pl.BlockSpec((None, C, tile_hw), lambda b, j: (b, 0, j)),
                # Constant index_map -> fetched once by the pipeline.
                pl.BlockSpec((C, 1), lambda b, j: (0, 0)),
                pl.BlockSpec((C, 1), lambda b, j: (0, 0)),
            ],
            out_specs=pl.BlockSpec((None, C, tile_hw), lambda b, j: (b, 0, j)),
        ),
        compiler_params=pltpu.CompilerParams(
            dimension_semantics=("parallel", "parallel"),   # megacore-shardable
            vmem_limit_bytes=_vmem_limit_bytes(block_bytes, param_bytes),
        ),
    )(x3, g2, b2)

    return out3.reshape(B, C, H, W)


def _forward_channels_last(x, gamma, beta):
    # Lane-dense fallback for HW < 128: put C on the lane axis.  The NHWC
    # permutes are tiny XLA copies (final Swin stage tensors are a few hundred
    # KiB) and buy fully unmasked loads/stores + a lane (XLU) reduction.
    B, C, H, W = x.shape
    HW = H * W
    rows = B * HW
    itemsize = jnp.dtype(x.dtype).itemsize

    xr = jnp.transpose(x, (0, 2, 3, 1)).reshape(rows, C)
    g2 = gamma.reshape(1, C)
    b2 = beta.reshape(1, C)

    tile_rows = _pick_tile_rows(rows, C, itemsize)
    n_tiles = pl.cdiv(rows, tile_rows)
    block_bytes = tile_rows * C * itemsize
    param_bytes = 8 * _ceil_to(C, 128) * jnp.dtype(gamma.dtype).itemsize

    outr = pl.pallas_call(
        _ln_nhwc_kernel,
        out_shape=jax.ShapeDtypeStruct((rows, C), x.dtype),
        grid_spec=pltpu.PrefetchScalarGridSpec(
            num_scalar_prefetch=0,
            grid=(n_tiles,),
            in_specs=[
                pl.BlockSpec((tile_rows, C), lambda i: (i, 0)),
                pl.BlockSpec((1, C), lambda i: (0, 0)),
                pl.BlockSpec((1, C), lambda i: (0, 0)),
            ],
            out_specs=pl.BlockSpec((tile_rows, C), lambda i: (i, 0)),
        ),
        compiler_params=pltpu.CompilerParams(
            dimension_semantics=("parallel",),
            vmem_limit_bytes=_vmem_limit_bytes(block_bytes, param_bytes),
        ),
    )(xr, g2, b2)

    return jnp.transpose(outr.reshape(B, H, W, C), (0, 3, 1, 2))


@jax.jit
def swin_head_forward(x, gamma, beta):
    """x: (B, C, H, W) -> (B, C, H, W); LayerNorm over C at every spatial position."""
    B, C, H, W = x.shape
    HW = H * W
    if HW < 128 and C >= 128 and C % 128 == 0:
        return _forward_channels_last(x, gamma, beta)
    return _forward_nchw(x, gamma, beta)


# ---------------------------------------------------------------------------
# Reference + tests
# ---------------------------------------------------------------------------

def _reference(x, gamma, beta):
    B, C, H, W = x.shape
    xr = jnp.transpose(x, (0, 2, 3, 1)).reshape(B, -1, C).astype(jnp.float32)
    mean = jnp.mean(xr, axis=-1, keepdims=True)
    var = jnp.mean((xr - mean) ** 2, axis=-1, keepdims=True)
    y = (xr - mean) / jnp.sqrt(var + EPS) * gamma + beta
    return jnp.transpose(y.reshape(B, H, W, C), (0, 3, 1, 2)).astype(x.dtype)


def _run_case(key, B, C, H, W, dtype=jnp.float32, atol=1e-3, rtol=1e-3):
    x = jax.random.normal(key, (B, C, H, W), dtype=jnp.float32).astype(dtype)
    # Deterministic non-trivial affine params (exercise the gamma/beta path).
    gamma = 1.0 + 0.1 * jnp.arange(C, dtype=jnp.float32)
    beta = 0.05 * jnp.arange(C, dtype=jnp.float32)

    out = jax.block_until_ready(swin_head_forward(x, gamma, beta))
    ref = _reference(x, gamma, beta)
    assert out.shape == (B, C, H, W) and out.dtype == x.dtype
    out32 = out.astype(jnp.float32)
    ref32 = ref.astype(jnp.float32)
    max_diff = jnp.max(jnp.abs(out32 - ref32))
    assert jnp.allclose(out32, ref32, atol=atol, rtol=rtol), (
        f"mismatch vs reference for shape {(B, C, H, W)} dtype={jnp.dtype(dtype).name}: "
        f"max|diff|={max_diff}")


if __name__ == "__main__":
    key = jax.random.PRNGKey(0)
    k1, k2, k3 = jax.random.split(key, 3)

    # Small requested shape: C=4, HW=256 -> NCHW path (exercises padded-sublane
    # masking of the C reduction; keep in CI).
    _run_case(k1, 2, 4, 16, 16)
    # Realistic Swin final-stage head: C=768, H=W=7 -> channels-last lane-dense
    # fallback (C fully on lanes, 2 grid steps for megacore).
    _run_case(k2, 2, 768, 7, 7)
    # bf16, B=1 -> NCHW path with >=256-lane tiles (512 B DMA rows) and the
    # guaranteed >=2-grid-step split for megacore.
    _run_case(k3, 1, 32, 32, 32, dtype=jnp.bfloat16, atol=5e-2, rtol=5e-2)

    print("KERNEL_OK")
</pallas_src>

<mosaic_0001>
module attributes {stable_mosaic.version = 11 : i64} {
  func.func @_ln_nchw_kernel(%arg0: i32, %arg1: i32, %arg2: memref<1x4x256xf32, #tpu.memory_space<vmem>>, %arg3: memref<4x1xf32, #tpu.memory_space<vmem>>, %arg4: memref<4x1xf32, #tpu.memory_space<vmem>>, %arg5: memref<1x4x256xf32, #tpu.memory_space<vmem>>) attributes {dimension_semantics = [#tpu.dimension_semantics<parallel>, #tpu.dimension_semantics<parallel>], iteration_bounds = array<i64: 2, 1>, scalar_prefetch = 0 : i64, scratch_operands = 0 : i64, tpu.core_type = #tpu.core_type<tc>, window_params = [{transform_indices = @transform_0, window_bounds = array<i64: 1, 4, 256>}, {pipeline_mode = #tpu.pipeline_mode<synchronous>, transform_indices = @transform_1, window_bounds = array<i64: 4, 1>}, {pipeline_mode = #tpu.pipeline_mode<synchronous>, transform_indices = @transform_2, window_bounds = array<i64: 4, 1>}, {transform_indices = @transform_3, window_bounds = array<i64: 1, 4, 256>}]} {
    %c0 = arith.constant 0 : index
    %c0_0 = arith.constant 0 : index
    %c0_1 = arith.constant 0 : index
    %0 = vector.load %arg2[%c0, %c0_0, %c0_1] : memref<1x4x256xf32, #tpu.memory_space<vmem>>, vector<1x4x256xf32>
    %1 = vector.shape_cast %0 : vector<1x4x256xf32> to vector<4x256xf32>
    %cst = arith.constant dense<0.000000e+00> : vector<256xf32>
    %2 = vector.multi_reduction <add>, %1, %cst [0] : vector<4x256xf32> to vector<256xf32>
    %3 = vector.shape_cast %2 : vector<256xf32> to vector<1x256xf32>
    %4 = arith.mulf %1, %1 : vector<4x256xf32>
    %cst_2 = arith.constant dense<0.000000e+00> : vector<256xf32>
    %5 = vector.multi_reduction <add>, %4, %cst_2 [0] : vector<4x256xf32> to vector<256xf32>
    %6 = vector.shape_cast %5 : vector<256xf32> to vector<1x256xf32>
    %cst_3 = arith.constant 2.500000e-01 : f32
    %7 = vector.broadcast %cst_3 : f32 to vector<1x256xf32>
    %8 = arith.mulf %3, %7 : vector<1x256xf32>
    %cst_4 = arith.constant 2.500000e-01 : f32
    %9 = vector.broadcast %cst_4 : f32 to vector<1x256xf32>
    %10 = arith.mulf %6, %9 : vector<1x256xf32>
    %11 = arith.mulf %8, %8 : vector<1x256xf32>
    %12 = arith.subf %10, %11 : vector<1x256xf32>
    %cst_5 = arith.constant 9.99999974E-6 : f32
    %13 = vector.broadcast %cst_5 : f32 to vector<1x256xf32>
    %14 = arith.addf %12, %13 : vector<1x256xf32>
    %15 = math.rsqrt %14 : vector<1x256xf32>
    %16 = vector.broadcast %8 : vector<1x256xf32> to vector<4x256xf32>
    %17 = arith.subf %1, %16 : vector<4x256xf32>
    %18 = vector.broadcast %15 : vector<1x256xf32> to vector<4x256xf32>
    %19 = arith.mulf %17, %18 : vector<4x256xf32>
    %c0_6 = arith.constant 0 : index
    %c0_7 = arith.constant 0 : index
    %20 = vector.load %arg3[%c0_6, %c0_7] : memref<4x1xf32, #tpu.memory_space<vmem>>, vector<4x1xf32>
    %21 = vector.broadcast %20 : vector<4x1xf32> to vector<4x256xf32>
    %22 = arith.mulf %19, %21 : vector<4x256xf32>
    %c0_8 = arith.constant 0 : index
    %c0_9 = arith.constant 0 : index
    %23 = vector.load %arg4[%c0_8, %c0_9] : memref<4x1xf32, #tpu.memory_space<vmem>>, vector<4x1xf32>
    %24 = vector.broadcast %23 : vector<4x1xf32> to vector<4x256xf32>
    %25 = arith.addf %22, %24 : vector<4x256xf32>
    %c0_10 = arith.constant 0 : index
    %c0_11 = arith.constant 0 : index
    %c0_12 = arith.constant 0 : index
    %26 = vector.load %arg5[%c0_10, %c0_11, %c0_12] : memref<1x4x256xf32, #tpu.memory_space<vmem>>, vector<1x4x256xf32>
    %27 = vector.shape_cast %26 : vector<1x4x256xf32> to vector<4x256xf32>
    %28 = vector.shape_cast %25 : vector<4x256xf32> to vector<1x4x256xf32>
    tpu.vector_store %arg5[%c0_10, %c0_11, %c0_12], %28 {strides = array<i32>} : memref<1x4x256xf32, #tpu.memory_space<vmem>>, vector<1x4x256xf32>,
    return
  }
  func.func @transform_0(%arg0: i32, %arg1: i32) -> (i32, i32, i32) {
    %c0_i32 = arith.constant 0 : i32
    %c0_i32_0 = arith.constant 0 : i32
    return %arg0, %c0_i32, %arg1 : i32, i32, i32
  }
  func.func @transform_1(%arg0: i32, %arg1: i32) -> (i32, i32) {
    %c0_i32 = arith.constant 0 : i32
    %c0_i32_0 = arith.constant 0 : i32
    %c0_i32_1 = arith.constant 0 : i32
    return %c0_i32, %c0_i32_0 : i32, i32
  }
  func.func @transform_2(%arg0: i32, %arg1: i32) -> (i32, i32) {
    %c0_i32 = arith.constant 0 : i32
    %c0_i32_0 = arith.constant 0 : i32
    %c0_i32_1 = arith.constant 0 : i32
    return %c0_i32, %c0_i32_0 : i32, i32
  }
  func.func @transform_3(%arg0: i32, %arg1: i32) -> (i32, i32, i32) {
    %c0_i32 = arith.constant 0 : i32
    %c0_i32_0 = arith.constant 0 : i32
    return %arg0, %c0_i32, %arg1 : i32, i32, i32
  }
}

</mosaic_0001>

<llo_original>
// kernel: swin_head_forward.1
$region0: #{swin_head_forward.1}
  #allocation0 [shape = 'u32[]', space=smem, size = 0x4, offset = 0x4, fixed_abs, tag = 'smem constant byte address 0x4 - core index']
  #allocation1 [shape = 'u32[144,128]{1,0:T(1,128)}', space=vmem, size = 0x12000, scoped, tag = 'internal scratch']
  %s0 = inlined_call_operand.vmem [shape: f32[2,4,256], index: 0, kind: input, shape index: {}]
  %s1 = inlined_call_operand.vmem [shape: f32[4,1], index: 1, kind: input, shape index: {}]
  %s2 = inlined_call_operand.vmem [shape: f32[4,1], index: 2, kind: input, shape index: {}]
  %s3 = inlined_call_operand.vmem [shape: f32[2,4,256], index: 3, kind: output, shape index: {}]
  %s4 = sld [smem:[#allocation0]]
  $region45: #{swin_head_forward.1} parent=0
    _
  %s6 = ssub.s32 1, %s4
  %s7 = scalar_select 0, %s6, %s4
  loop: start=0, step=1, limit=4
  $region2: #{swin_head_forward.1} parent=0 // loop_pre_header
    _
  $region3: #{swin_head_forward.1} parent=0 // loop_header
    %s9 = sphi 0, %s13
    %p10 = scmp.ge.s32.totalorder %s9, 4
    %s16 = sphi 0, %s28
    %s17 = sphi 0, %s24
    %s18 = sphi 0, %s16
    %s19 = sphi 0, %s17
    %s20 = sphi 0, %s18
    %s21 = sphi 0, %s19
    %s33 = sphi 0, %s35
    %s36 = sphi 0, %s33
    %s37 = sphi 0, %s36
    %s53 = sphi 0, %s37
    %s57 = sphi 0, %s57
    %s59 = sphi 0, %s57
    %s60 = sphi 0, %s59
    %s74 = sphi 0, %s60
    %s78 = sphi 0, %s78
    %s80 = sphi 0, %s78
    %s81 = sphi 0, %s80
    %s95 = sphi 0, %s81
    %s103 = sphi 0, %s105
    %s106 = sphi 0, %s103
    %s107 = sphi 0, %s106
    %s123 = sphi 0, %s107
  $region4: #{swin_head_forward.1} parent=0 // loop_header_branch
    %12 = sbr.rel (%p10) target = $region8
  $region5: #{swin_head_forward.1} parent=0 // loop_body
    %s14 = ssub.s32 %s9, 1
    %s15 = ssub.s32 %s9, 2
    %s22 = sadd.s32 1, %s17
    %p23 = scmp.ge.s32.totalorder %s22, 1
    %s24 = scalar_select %p23, 0, %s22
    %s25 = sadd.s32 1, %s16
    %s26 = scalar_select %p23, %s25, %s16
    %p27 = scmp.ge.s32.totalorder %s26, 2
    %s28 = scalar_select %p27, 0, %s26
    %s29 = ssub.s32 %s16, %s28
    %s30 = ssub.s32 %s17, %s24
    %s31 = sor.u32 %s29, %s30
    %p32 = scmp.eq.s32.totalorder %s31, 0
    %s34 = sadd.s32 %s33, 1
    %s35 = scalar_select %p32, %s33, %s34
    %p38 = pneg %p32
    %p39 = scmp.eq.s32.totalorder %s9, 1
    %p40 = por %p38, %p39
    %p41 = scmp.ne.s32.totalorder %s33, %s36
    %p42 = scmp.eq.s32.totalorder %s9, 0
    %p43 = por %p41, %p42
    %p44 = scmp.ne.s32.totalorder %s33, %s36
    %p45 = scmp.eq.s32.totalorder %s14, 1
    %p46 = por %p44, %p45
    %p47 = scmp.ne.s32.totalorder %s36, %s37
    %p48 = scmp.eq.s32.totalorder %s14, 0
    %p49 = por %p47, %p48
    %p50 = scmp.ne.s32.totalorder %s36, %s37
    %p51 = scmp.eq.s32.totalorder %s15, 1
    %p52 = por %p50, %p51
    %p54 = scmp.ne.s32.totalorder %s37, %s53
    %p55 = scmp.eq.s32.totalorder %s15, 0
    %p56 = por %p54, %p55
    %s58 = sadd.s32 %s57, 1
    %p61 = scmp.eq.s32.totalorder %s9, 1
    %p62 = scmp.ne.s32.totalorder %s57, %s59
    %p63 = scmp.eq.s32.totalorder %s9, 0
    %p64 = por %p62, %p63
    %p65 = scmp.ne.s32.totalorder %s57, %s59
    %p66 = scmp.eq.s32.totalorder %s14, 1
    %p67 = por %p65, %p66
    %p68 = scmp.ne.s32.totalorder %s59, %s60
    %p69 = scmp.eq.s32.totalorder %s14, 0
    %p70 = por %p68, %p69
    %p71 = scmp.ne.s32.totalorder %s59, %s60
    %p72 = scmp.eq.s32.totalorder %s15, 1
    %p73 = por %p71, %p72
    %p75 = scmp.ne.s32.totalorder %s60, %s74
    %p76 = scmp.eq.s32.totalorder %s15, 0
    %p77 = por %p75, %p76
    %s79 = sadd.s32 %s78, 1
    %p82 = scmp.eq.s32.totalorder %s9, 1
    %p83 = scmp.ne.s32.totalorder %s78, %s80
    %p84 = scmp.eq.s32.totalorder %s9, 0
    %p85 = por %p83, %p84
    %p86 = scmp.ne.s32.totalorder %s78, %s80
    %p87 = scmp.eq.s32.totalorder %s14, 1
    %p88 = por %p86, %p87
    %p89 = scmp.ne.s32.totalorder %s80, %s81
    %p90 = scmp.eq.s32.totalorder %s14, 0
    %p91 = por %p89, %p90
    %p92 = scmp.ne.s32.totalorder %s80, %s81
    %p93 = scmp.eq.s32.totalorder %s15, 1
    %p94 = por %p92, %p93
    %p96 = scmp.ne.s32.totalorder %s81, %s95
    %p97 = scmp.eq.s32.totalorder %s15, 0
    %p98 = por %p96, %p97
    %s99 = ssub.s32 %s16, %s28
    %s100 = ssub.s32 %s17, %s24
    %s101 = sor.u32 %s99, %s100
    %p102 = scmp.eq.s32.totalorder %s101, 0
    %s104 = sadd.s32 %s103, 1
    %s105 = scalar_select %p102, %s103, %s104
    %p108 = pneg %p102
    %p109 = scmp.eq.s32.totalorder %s9, 1
    %p110 = por %p108, %p109
    %p111 = scmp.ne.s32.totalorder %s103, %s106
    %p112 = scmp.eq.s32.totalorder %s9, 0
    %p113 = por %p111, %p112
    %p114 = scmp.ne.s32.totalorder %s103, %s106
    %p115 = scmp.eq.s32.totalorder %s14, 1
    %p116 = por %p114, %p115
    %p117 = scmp.ne.s32.totalorder %s106, %s107
    %p118 = scmp.eq.s32.totalorder %s14, 0
    %p119 = por %p117, %p118
    %p120 = scmp.ne.s32.totalorder %s106, %s107
    %p121 = scmp.eq.s32.totalorder %s15, 1
    %p122 = por %p120, %p121
    %p124 = scmp.ne.s32.totalorder %s107, %s123
    %p125 = scmp.eq.s32.totalorder %s15, 0
    %p126 = por %p124, %p125
    %p127 = scmp.le.s32.totalorder 1, %s9
    %p128 = scmp.lt.s32.totalorder %s9, 3
    %p129 = pnand %p127, %p128
    %p130 = pneg %p129
    // Predicated region
    $region9: #{swin_head_forward.1} parent=5 // pred_check
      _
    $region10: #{swin_head_forward.1} parent=5 // pred_check_branch
      %132 = sbr.rel (%p129) target = $region12
    $region11: #{swin_head_forward.1} parent=5 // pred_region
      %s133 = ssub.s32 %s9, 1
      // Predicated region
      $region13: #{swin_head_forward.1} parent=11 // pred_check
        %p134 = pneg %p70
      $region14: #{swin_head_forward.1} parent=11 // pred_check_branch
        %136 = sbr.rel (%p134) target = $region16
      $region15: #{swin_head_forward.1} parent=11 // pred_region
        _
      $region16: #{swin_head_forward.1} parent=11 // pred_fallthru
        _
      // Predicated region
      $region17: #{swin_head_forward.1} parent=11 // pred_check
        %p137 = pneg %p91
      $region18: #{swin_head_forward.1} parent=11 // pred_check_branch
        %139 = sbr.rel (%p137) target = $region20
      $region19: #{swin_head_forward.1} parent=11 // pred_region
        _
      $region20: #{swin_head_forward.1} parent=11 // pred_fallthru
        _
    $region12: #{swin_head_forward.1} parent=5 // pred_fallthru
      _
    %p140 = scmp.lt.s32.totalorder %s9, 2
    // Predicated region
    $region21: #{swin_head_forward.1} parent=5 // pred_check
      %p141 = pneg %p140
    $region22: #{swin_head_forward.1} parent=5 // pred_check_branch
      %143 = sbr.rel (%p141) target = $region24
    $region23: #{swin_head_forward.1} parent=5 // pred_region
      // Predicated region
      $region25: #{swin_head_forward.1} parent=23 // pred_check
        %p144 = pneg %p43
      $region26: #{swin_head_forward.1} parent=23 // pred_check_branch
        %146 = sbr.rel (%p144) target = $region28
      $region27: #{swin_head_forward.1} parent=23 // pred_region
        %s147 = smul.u32 2, %s17
        %p148 = scmp.lt.s32.totalorder %s16, 1
        %s149 = scalar_select %p148, %s16, 1
        %p150 = scmp.lt.s32.totalorder %s147, 1
        %s151 = scalar_select %p150, %s147, 1
        %s152 = smul.addr %s149, 2
        %s153 = sadd.s32 %s151, %s152
        %s154 = smul.addr %s153, 4
        %s155 = scalar_lea.vmem %s0, %s154
        %s156 = smul.u32 2, %s17
      $region28: #{swin_head_forward.1} parent=23 // pred_fallthru
        _
    $region24: #{swin_head_forward.1} parent=5 // pred_fallthru
      _
    %p157 = scmp.le.s32.totalorder 1, %s9
    %p158 = scmp.lt.s32.totalorder %s9, 3
    %p159 = pnand %p157, %p158
    %p160 = pneg %p159
    // Predicated region
    $region29: #{swin_head_forward.1} parent=5 // pred_check
      _
    $region30: #{swin_head_forward.1} parent=5 // pred_check_branch
      %162 = sbr.rel (%p159) target = $region32
    $region31: #{swin_head_forward.1} parent=5 // pred_region
      %s163 = ssub.s32 %s9, 1
      %s164 = smul.u32 2, %s19
      %p165 = scmp.lt.s32.totalorder %s18, 1
      %s166 = scalar_select %p165, %s18, 1
      %p167 = scmp.lt.s32.totalorder %s164, 1
      %s168 = scalar_select %p167, %s164, 1
      %s169 = smul.addr %s166, 2
      %s170 = sadd.s32 %s168, %s169
      %s171 = smul.addr %s170, 4
      %s172 = scalar_lea.vmem %s0, %s171
      %p173 = pneg %p49
      %p174 = pneg %p46
      %p175 = pneg %p70
      %p176 = pneg %p67
      %p177 = pneg %p91
      %p178 = pneg %p88
      %p179 = pneg %p119
      %p180 = pneg %p116
      %s181 = smul.u32 2, %s19
      %p182 = scmp.lt.s32.totalorder %s18, 1
      %s183 = scalar_select %p182, %s18, 1
      %p184 = scmp.lt.s32.totalorder %s181, 1
      %s185 = scalar_select %p184, %s181, 1
      %s186 = smul.addr %s183, 2
      %s187 = sadd.s32 %s185, %s186
      %s188 = smul.addr %s187, 4
      %s189 = scalar_lea.vmem %s3, %s188
      %s190 = smul.u32 2, %s19
      %p191 = scmp.lt.s32.totalorder %s18, 1
      %s192 = scalar_select %p191, %s18, 1
      %p193 = scmp.lt.s32.totalorder %s190, 1
      %s194 = scalar_select %p193, %s190, 1
      %s195 = smul.addr %s192, 2
      %s196 = sadd.s32 %s194, %s195
      %s197 = smul.addr %s196, 4
      %s198 = scalar_lea.vmem %s0, %s197
      %s199 = smul.u32 2, %s19
      %s200 = smul.u32 2, %s19
      %p201 = scmp.lt.s32.totalorder %s18, 1
      %s202 = scalar_select %p201, %s18, 1
      %p203 = scmp.lt.s32.totalorder %s200, 1
      %s204 = scalar_select %p203, %s200, 1
      %s205 = smul.addr %s202, 2
      %s206 = sadd.s32 %s204, %s205
      %s207 = smul.addr %s206, 4
      %s208 = scalar_lea.vmem %s3, %s207
      %s209 = smul.u32 2, %s19
      %v210 = vld [vmem:[%s198] sm:$0xff]
      %v212 = vcombine.high %v210, %v210
      %vm214 = vcmask 1043456
      %v215 = vsel %vm214, %v210, 0.0
      %v216 = vrot.slane %v215, 4
      %v217 = vadd.f32 %v215, %v216
      %v218 = vrot.slane %v217, 2
      %v219 = vadd.f32 %v217, %v218
      %v220 = vrot.slane %v219, 1
      %v221 = vadd.f32 %v219, %v220
      %v222 = vsel %vm214, %v212, 0.0
      %v223 = vrot.slane %v222, 4
      %v224 = vadd.f32 %v222, %v223
      %v225 = vrot.slane %v224, 2
      %v226 = vadd.f32 %v224, %v225
      %v227 = vrot.slane %v226, 1
      %v228 = vadd.f32 %v226, %v227
      %v229 = vmul.f32 %v210, %v210
      %v231 = vcombine.high %v229, %v229
      %v233 = vsel %vm214, %v229, 0.0
      %v234 = vrot.slane %v233, 4
      %v235 = vadd.f32 %v233, %v234
      %v236 = vrot.slane %v235, 2
      %v237 = vadd.f32 %v235, %v236
      %v238 = vrot.slane %v237, 1
      %v239 = vadd.f32 %v237, %v238
      %v240 = vsel %vm214, %v231, 0.0
      %v241 = vrot.slane %v240, 4
      %v242 = vadd.f32 %v240, %v241
      %v243 = vrot.slane %v242, 2
      %v244 = vadd.f32 %v242, %v243
      %v245 = vrot.slane %v244, 1
      %v246 = vadd.f32 %v244, %v245
      %v247 = vmul.f32 %v221, 0.25
      %v248 = vmul.f32 %v228, 0.25
      %v249 = vmul.f32 %v239, 0.25
      %v250 = vmul.f32 %v246, 0.25
      %v251 = vmul.f32 %v247, %v247
      %v252 = vmul.f32 %v248, %v248
      %v253 = vsub.f32 %v249, %v251
      %v254 = vsub.f32 %v250, %v252
      %v255 = vadd.f32 %v253, 1e-05
      %v256 = vadd.f32 %v254, 1e-05
      %v257 = vrsqrt.pop %v255
      %v258 = vrsqrt.pop %v256
      %v261 = vcombine.low %v247, %v248
      %v263 = vsub.f32 %v210, %v261
      %v266 = vcombine.low %v257, %v258
      %v268 = vmul.f32 %v263, %v266
      %v269 = vld [vmem:[%s1] sm:$0xf]
      %271 = vset.pattern.permute.xlu0 0
      %272 = vperm.xlu0 %271, %v269
      %v273 = vpop.permute.xlu0 %272
      %v275 = vunpack.c.l.s4 839922192
      %v276 = vunpack.c.0.s8 %v275
      %v277 = vlaneseq
      %v278 = vshrl.u32 %v277, 7
      %v279 = vsub.s32 %v276, %v278
      %v280 = vrot.slane %v273, %v279
      %v282 = vmul.f32 %v268, %v280
      %v283 = vld [vmem:[%s2] sm:$0xf]
      %285 = vset.pattern.permute.xlu0 0
      %286 = vperm.xlu0 %285, %v283
      %v287 = vpop.permute.xlu0 %286
      %v289 = vunpack.c.l.s4 839922192
      %v290 = vunpack.c.0.s8 %v289
      %v291 = vlaneseq
      %v292 = vshrl.u32 %v291, 7
      %v293 = vsub.s32 %v290, %v292
      %v294 = vrot.slane %v287, %v293
      %v296 = vadd.f32 %v282, %v294
      %297 = vst [vmem:[%s208] sm:$0xff] %v296
      %s298 = smul.u32 2, %s19
      %p299 = scmp.lt.s32.totalorder %s18, 1
      %s300 = scalar_select %p299, %s18, 1
      %p301 = scmp.lt.s32.totalorder %s298, 1
      %s302 = scalar_select %p301, %s298, 1
      %s303 = smul.addr %s300, 2
      %s304 = sadd.s32 %s302, %s303
      %s305 = smul.addr %s304, 4
      %s306 = scalar_lea.vmem %s3, %s305
      // Predicated region
      $region33: #{swin_head_forward.1} parent=31 // pred_check
        %p307 = pneg %p116
      $region34: #{swin_head_forward.1} parent=31 // pred_check_branch
        %309 = sbr.rel (%p307) target = $region36
      $region35: #{swin_head_forward.1} parent=31 // pred_region
        %s310 = smul.u32 2, %s19
      $region36: #{swin_head_forward.1} parent=31 // pred_fallthru
        _
    $region32: #{swin_head_forward.1} parent=5 // pred_fallthru
      _
    %p311 = scmp.le.s32.totalorder 2, %s9
    // Predicated region
    $region37: #{swin_head_forward.1} parent=5 // pred_check
      %p312 = pneg %p311
    $region38: #{swin_head_forward.1} parent=5 // pred_check_branch
      %314 = sbr.rel (%p312) target = $region40
    $region39: #{swin_head_forward.1} parent=5 // pred_region
      %s315 = ssub.s32 %s9, 2
      // Predicated region
      $region41: #{swin_head_forward.1} parent=39 // pred_check
        %p316 = pneg %p122
      $region42: #{swin_head_forward.1} parent=39 // pred_check_branch
        %318 = sbr.rel (%p316) target = $region44
      $region43: #{swin_head_forward.1} parent=39 // pred_region
        %s319 = smul.u32 2, %s21
        %p320 = scmp.lt.s32.totalorder %s20, 1
        %s321 = scalar_select %p320, %s20, 1
        %p322 = scmp.lt.s32.totalorder %s319, 1
        %s323 = scalar_select %p322, %s319, 1
        %s324 = smul.addr %s321, 2
        %s325 = sadd.s32 %s323, %s324
        %s326 = smul.addr %s325, 4
        %s327 = scalar_lea.vmem %s3, %s326
      $region44: #{swin_head_forward.1} parent=39 // pred_fallthru
        _
    $region40: #{swin_head_forward.1} parent=5 // pred_fallthru
      _
  $region6: #{swin_head_forward.1} parent=0 // loop_footer
    %s13 = sadd.s32 1, %s9
  $region7: #{swin_head_forward.1} parent=0 // loop_footer_branch
    %8 = sbr.rel target = $region3
  $region8: #{swin_head_forward.1} parent=0 // loop_exit
    _

</llo_original>
